<compile_context>
chip_gen: v7x
topology: tpu7x:2x2x1
jax: 0.10.0
libtpu: 0.0.40
codegen_flags: <defaults>
</compile_context>

<pallas_src>
import functools

import jax
import jax.numpy as jnp
import numpy as np
from jax import lax
from jax.experimental import pallas as pl
from jax.experimental.pallas import tpu as pltpu

NEG_SLOPE = 0.01   # nn.LeakyReLU default
BN_EPS = 1e-5      # nn.BatchNorm1d default


def _fold_combine(s, fold, c):
    """s: (fold*c, 1) per-row lane sums -> per-channel totals, broadcast back to (fold*c, 1).

    Row r belongs to channel r % c.  Summing `fold` sublane rotations by multiples of c gives
    every row the total of its channel group; no sublane slicing/concat needed, and the result
    is independent of the rotation direction (the shift set {c,2c,...} is closed under
    negation mod fold*c)."""
    if fold == 1:
        return s
    tot = s
    for f in range(1, fold):
        tot = tot + pltpu.roll(s, shift=f * c, axis=0)
    return tot


def _dsct1d_kernel(xf_ref, p1_ref, pwb_ref, p2_ref, out_ref, *,
                   K, F, Cin, Cout, cnt, n_excl_row):
    Lsp = xf_ref.shape[1]                      # 128-aligned fused (batch,time) lane count
    n_excl = float(F * n_excl_row)             # excluded lanes per channel (all fold rows)
    inv_cnt = 1.0 / float(cnt)                 # 1 / (N * Lout)

    xv = xf_ref[...]                           # (F*Cin, Lsp) loaded once
    p1 = p1_ref[...]                           # (F*Cin, K+3) = [dw taps | db | g1 | b1]
    p2 = p2_ref[...]                           # (F*Cout, 3)  = [pb | g2 | b2]

    db = p1[:, K:K + 1]
    g1 = p1[:, K + 1:K + 2]
    b1 = p1[:, K + 2:K + 3]
    pb = p2[:, 0:1]
    g2 = p2[:, 1:2]
    b2 = p2[:, 2:3]

    # ---- Depthwise ConvTranspose1d (stride=1, padding=0, groups=Cin) ----
    # y[r, i] = sum_s xv[r, i+s] * dw[r, K-1-s]; shifted operands are register-resident cyclic
    # rolls (wrapped lanes only land in excluded tail lanes and only read the leading zeros).
    y = xv * p1[:, K - 1:K]
    for s in range(1, K):
        shifted = pltpu.roll(xv, shift=Lsp - s, axis=1)    # shifted[:, i] = xv[:, i + s]
        y = y + shifted * p1[:, K - 1 - s:K - s]
    y = y + db

    # ---- BatchNorm1d #1 (training-mode biased batch stats) + LeakyReLU, maskless ----
    # Every excluded lane of y equals db exactly, so unmasked sums minus the analytic tail
    # contribution reproduce the masked statistics.
    s1 = _fold_combine(jnp.sum(y, axis=1, keepdims=True), F, Cin)
    m1 = (s1 - n_excl * db) * inv_cnt
    yc = y - m1
    d1 = db - m1                                            # excluded-lane residual (exact)
    s2 = _fold_combine(jnp.sum(yc * yc, axis=1, keepdims=True), F, Cin)
    v1 = (s2 - n_excl * (d1 * d1)) * inv_cnt
    sc1 = lax.rsqrt(v1 + BN_EPS) * g1
    y1 = yc * sc1 + b1
    y1 = jnp.maximum(y1, NEG_SLOPE * y1)

    # ---- Pointwise 1x1 Conv1d: ONE (F*Cout, F*Cin) x (F*Cin, Lsp) matmul ----
    # (block-diagonal weight absorbs the batch fold; contraction rows = F*Cin).
    # TODO(synk): for very small channel counts an unrolled VPU sum-of-scaled-rows would skip
    #             the MXU push/pop latency; kept as jnp.dot for generality/robustness.
    z = jnp.dot(pwb_ref[...], y1, preferred_element_type=jnp.float32) + pb

    # ---- BatchNorm1d #2 + LeakyReLU, maskless ----
    # All excluded lanes of z carry the same per-row constant; read it from the last lane
    # (always excluded) so the analytic correction cancels exactly with the slab contents.
    t2 = z[:, Lsp - 1:Lsp]
    s1z = _fold_combine(jnp.sum(z, axis=1, keepdims=True), F, Cout)
    m2 = (s1z - n_excl * t2) * inv_cnt
    zc = z - m2
    d2 = t2 - m2
    s2z = _fold_combine(jnp.sum(zc * zc, axis=1, keepdims=True), F, Cout)
    v2 = (s2z - n_excl * (d2 * d2)) * inv_cnt
    sc2 = lax.rsqrt(v2 + BN_EPS) * g2
    w = zc * sc2 + b2
    out_ref[...] = jnp.maximum(w, NEG_SLOPE * w).astype(out_ref.dtype)   # unmasked, lane-dense


def _pick_fold(n, cin):
    """Smallest divisor of the batch that fills an 8-sublane f32 vreg group (else the largest)."""
    divs = [f for f in range(1, n + 1) if n % f == 0]
    for f in divs:
        if f * cin >= 8:
            return f
    return divs[-1]


def dep_sep_conv_transpose1d(x, dw, db, pw, pb, g1, b1, g2, b2):
    """x: (N, Cin, L) f32.  Returns (N, Cout, Lout) with Lout = L + K - 1 (stride=1, pad=0)."""
    N, Cin, L = x.shape
    Cout = pw.shape[0]
    K = dw.shape[1]
    Lout = L + K - 1                     # (L-1)*1 - 2*0 + (K-1) + 1
    Lp = Lout + (K - 1)                  # per-sample padded segment length (= L + 2(K-1))
    F = _pick_fold(N, Cin)               # batch fold factor onto sublanes
    Ns = N // F                          # samples per fold row (fused into lanes)
    Ls = Ns * Lp
    Lsp = max(128, ((Ls + 127) // 128) * 128)   # 128-aligned lanes -> unmasked stores
    cnt = N * Lout                       # valid positions per channel (BN population)
    n_excl_row = Lsp - Ns * Lout         # excluded lanes per slab row

    # --- wrapper-side layout plumbing (plain JAX, no compute) ---
    xp = jnp.pad(x, ((0, 0), (0, 0), (K - 1, K - 1)))             # (N, Cin, Lp)
    xg = xp.reshape(F, Ns, Cin, Lp).transpose(0, 2, 1, 3)         # (F, Cin, Ns, Lp)
    xf = xg.reshape(F * Cin, Ls)                                  # row = f*Cin + c
    xf = jnp.pad(xf, ((0, 0), (0, Lsp - Ls)))                     # (F*Cin, Lsp)

    tile = lambda a: jnp.tile(a, (F, 1))
    p1 = jnp.concatenate([tile(dw), tile(db), tile(g1), tile(b1)], axis=1)   # (F*Cin, K+3)
    p2 = jnp.concatenate([tile(pb), tile(g2), tile(b2)], axis=1)             # (F*Cout, 3)
    pwb = jnp.kron(jnp.eye(F, dtype=pw.dtype), pw)                           # block-diag (F*Cout, F*Cin)

    kernel = functools.partial(_dsct1d_kernel, K=K, F=F, Cin=Cin, Cout=Cout,
                               cnt=cnt, n_excl_row=n_excl_row)
    vmem = pl.BlockSpec(memory_space=pltpu.MemorySpace.VMEM)

    out2d = pl.pallas_call(
        kernel,
        out_shape=jax.ShapeDtypeStruct((F * Cout, Lsp), jnp.float32),
        in_specs=[vmem] * 4,
        out_specs=vmem,
        compiler_params=pltpu.CompilerParams(vmem_limit_bytes=32 * 1024 * 1024),
    )(xf, p1, pwb, p2)

    # Strip pad tails, unfold the batch, restore PyTorch NCL layout.
    z = out2d[:, :Ls].reshape(F, Cout, Ns, Lp)[..., :Lout]        # (F, Cout, Ns, Lout)
    return z.transpose(0, 2, 1, 3).reshape(N, Cout, Lout)


def _reference(x, dw, db, pw, pb, g1, b1, g2, b2):
    x = np.asarray(x, np.float32)
    dw, db, pw, pb = map(np.asarray, (dw, db, pw, pb))
    g1, b1, g2, b2 = map(np.asarray, (g1, b1, g2, b2))
    N, Cin, L = x.shape
    K = dw.shape[1]
    Lout = L + K - 1
    y = np.zeros((N, Cin, Lout), np.float32)
    for n in range(N):
        for c in range(Cin):
            for j in range(L):
                for k in range(K):
                    y[n, c, j + k] += x[n, c, j] * dw[c, k]
    y += db[None, :, :]
    m = y.mean(axis=(0, 2), keepdims=True)
    v = ((y - m) ** 2).mean(axis=(0, 2), keepdims=True)
    y = (y - m) / np.sqrt(v + BN_EPS) * g1[None] + b1[None]
    y = np.where(y >= 0, y, NEG_SLOPE * y)
    z = np.einsum('oc,ncl->nol', pw, y) + pb[None, :, :]
    m = z.mean(axis=(0, 2), keepdims=True)
    v = ((z - m) ** 2).mean(axis=(0, 2), keepdims=True)
    z = (z - m) / np.sqrt(v + BN_EPS) * g2[None] + b2[None]
    z = np.where(z >= 0, z, NEG_SLOPE * z)
    return z


if __name__ == "__main__":
    # Small shapes consistent with the module: batch=2, Cin=4, Cout=8, L=16, kernel_size=3.
    N, Cin, Cout, L, K = 2, 4, 8, 16, 3

    key = jax.random.PRNGKey(0)
    k_x, k_dw, k_db, k_pw, k_pb = jax.random.split(key, 5)

    x = jax.random.normal(k_x, (N, Cin, L), jnp.float32)

    # Deterministic synthetic parameters (PyTorch-style uniform ranges):
    dw = jax.random.uniform(k_dw, (Cin, K), jnp.float32, -0.5, 0.5)     # ConvTranspose1d weight (Cin,1,K) squeezed
    db = jax.random.uniform(k_db, (Cin, 1), jnp.float32, -0.5, 0.5)     # ConvTranspose1d bias
    pw = jax.random.uniform(k_pw, (Cout, Cin), jnp.float32, -0.5, 0.5)  # Conv1d 1x1 weight (Cout,Cin,1) squeezed
    pb = jax.random.uniform(k_pb, (Cout, 1), jnp.float32, -0.5, 0.5)    # Conv1d bias
    g1 = jnp.ones((Cin, 1), jnp.float32)    # BatchNorm1d default affine params
    b1 = jnp.zeros((Cin, 1), jnp.float32)
    g2 = jnp.ones((Cout, 1), jnp.float32)
    b2 = jnp.zeros((Cout, 1), jnp.float32)

    out = dep_sep_conv_transpose1d(x, dw, db, pw, pb, g1, b1, g2, b2)
    jax.block_until_ready(out)

    ref = _reference(x, dw, db, pw, pb, g1, b1, g2, b2)
    np.testing.assert_allclose(np.asarray(out), ref, rtol=2e-3, atol=2e-3)
    print("KERNEL_OK")
</pallas_src>

<mosaic_0001>
module attributes {stable_mosaic.version = 11 : i64} {
  func.func @_dsct1d_kernel(%arg0: memref<8x128xf32, #tpu.memory_space<vmem>>, %arg1: memref<8x6xf32, #tpu.memory_space<vmem>>, %arg2: memref<16x8xf32, #tpu.memory_space<vmem>>, %arg3: memref<16x3xf32, #tpu.memory_space<vmem>>, %arg4: memref<16x128xf32, #tpu.memory_space<vmem>>) attributes {dimension_semantics = [], scalar_prefetch = 0 : i64, scratch_operands = 0 : i64, tpu.core_type = #tpu.core_type<tc>} {
    %c0 = arith.constant 0 : index
    %c0_0 = arith.constant 0 : index
    %0 = vector.load %arg0[%c0, %c0_0] : memref<8x128xf32, #tpu.memory_space<vmem>>, vector<8x128xf32>
    %c0_1 = arith.constant 0 : index
    %c0_2 = arith.constant 0 : index
    %1 = vector.load %arg1[%c0_1, %c0_2] : memref<8x6xf32, #tpu.memory_space<vmem>>, vector<8x6xf32>
    %c0_3 = arith.constant 0 : index
    %c0_4 = arith.constant 0 : index
    %2 = vector.load %arg3[%c0_3, %c0_4] : memref<16x3xf32, #tpu.memory_space<vmem>>, vector<16x3xf32>
    %3 = vector.extract_strided_slice %1 {offsets = [0, 3], sizes = [8, 1], strides = [1, 1]} : vector<8x6xf32> to vector<8x1xf32>
    %4 = vector.extract_strided_slice %1 {offsets = [0, 4], sizes = [8, 1], strides = [1, 1]} : vector<8x6xf32> to vector<8x1xf32>
    %5 = vector.extract_strided_slice %1 {offsets = [0, 5], sizes = [8, 1], strides = [1, 1]} : vector<8x6xf32> to vector<8x1xf32>
    %6 = vector.extract_strided_slice %2 {offsets = [0, 0], sizes = [16, 1], strides = [1, 1]} : vector<16x3xf32> to vector<16x1xf32>
    %7 = vector.extract_strided_slice %2 {offsets = [0, 1], sizes = [16, 1], strides = [1, 1]} : vector<16x3xf32> to vector<16x1xf32>
    %8 = vector.extract_strided_slice %2 {offsets = [0, 2], sizes = [16, 1], strides = [1, 1]} : vector<16x3xf32> to vector<16x1xf32>
    %9 = vector.extract_strided_slice %1 {offsets = [0, 2], sizes = [8, 1], strides = [1, 1]} : vector<8x6xf32> to vector<8x1xf32>
    %10 = vector.broadcast %9 : vector<8x1xf32> to vector<8x128xf32>
    %11 = arith.mulf %0, %10 : vector<8x128xf32>
    %c127_i32 = arith.constant 127 : i32
    %12 = tpu.dynamic_rotate %0 by %c127_i32 dim 1 : vector<8x128xf32>, i32 -> vector<8x128xf32>
    %13 = vector.extract_strided_slice %1 {offsets = [0, 1], sizes = [8, 1], strides = [1, 1]} : vector<8x6xf32> to vector<8x1xf32>
    %14 = vector.broadcast %13 : vector<8x1xf32> to vector<8x128xf32>
    %15 = arith.mulf %12, %14 : vector<8x128xf32>
    %16 = arith.addf %11, %15 : vector<8x128xf32>
    %c126_i32 = arith.constant 126 : i32
    %17 = tpu.dynamic_rotate %0 by %c126_i32 dim 1 : vector<8x128xf32>, i32 -> vector<8x128xf32>
    %18 = vector.extract_strided_slice %1 {offsets = [0, 0], sizes = [8, 1], strides = [1, 1]} : vector<8x6xf32> to vector<8x1xf32>
    %19 = vector.broadcast %18 : vector<8x1xf32> to vector<8x128xf32>
    %20 = arith.mulf %17, %19 : vector<8x128xf32>
    %21 = arith.addf %16, %20 : vector<8x128xf32>
    %22 = vector.broadcast %3 : vector<8x1xf32> to vector<8x128xf32>
    %23 = arith.addf %21, %22 : vector<8x128xf32>
    %cst = arith.constant dense<0.000000e+00> : vector<8xf32>
    %24 = vector.multi_reduction <add>, %23, %cst [1] : vector<8x128xf32> to vector<8xf32>
    %25 = vector.shape_cast %24 : vector<8xf32> to vector<8x1xf32>
    %c4_i32 = arith.constant 4 : i32
    %26 = tpu.dynamic_rotate %25 by %c4_i32 dim 0 : vector<8x1xf32>, i32 -> vector<8x1xf32>
    %27 = arith.addf %25, %26 : vector<8x1xf32>
    %cst_5 = arith.constant 2.200000e+02 : f32
    %28 = vector.broadcast %cst_5 : f32 to vector<8x1xf32>
    %29 = arith.mulf %28, %3 : vector<8x1xf32>
    %30 = arith.subf %27, %29 : vector<8x1xf32>
    %cst_6 = arith.constant 0.027777778 : f32
    %31 = vector.broadcast %cst_6 : f32 to vector<8x1xf32>
    %32 = arith.mulf %30, %31 : vector<8x1xf32>
    %33 = vector.broadcast %32 : vector<8x1xf32> to vector<8x128xf32>
    %34 = arith.subf %23, %33 : vector<8x128xf32>
    %35 = arith.subf %3, %32 : vector<8x1xf32>
    %36 = arith.mulf %34, %34 : vector<8x128xf32>
    %cst_7 = arith.constant dense<0.000000e+00> : vector<8xf32>
    %37 = vector.multi_reduction <add>, %36, %cst_7 [1] : vector<8x128xf32> to vector<8xf32>
    %38 = vector.shape_cast %37 : vector<8xf32> to vector<8x1xf32>
    %c4_i32_8 = arith.constant 4 : i32
    %39 = tpu.dynamic_rotate %38 by %c4_i32_8 dim 0 : vector<8x1xf32>, i32 -> vector<8x1xf32>
    %40 = arith.addf %38, %39 : vector<8x1xf32>
    %41 = arith.mulf %35, %35 : vector<8x1xf32>
    %cst_9 = arith.constant 2.200000e+02 : f32
    %42 = vector.broadcast %cst_9 : f32 to vector<8x1xf32>
    %43 = arith.mulf %42, %41 : vector<8x1xf32>
    %44 = arith.subf %40, %43 : vector<8x1xf32>
    %cst_10 = arith.constant 0.027777778 : f32
    %45 = vector.broadcast %cst_10 : f32 to vector<8x1xf32>
    %46 = arith.mulf %44, %45 : vector<8x1xf32>
    %cst_11 = arith.constant 9.99999974E-6 : f32
    %47 = vector.broadcast %cst_11 : f32 to vector<8x1xf32>
    %48 = arith.addf %46, %47 : vector<8x1xf32>
    %49 = math.rsqrt %48 : vector<8x1xf32>
    %50 = arith.mulf %49, %4 : vector<8x1xf32>
    %51 = vector.broadcast %50 : vector<8x1xf32> to vector<8x128xf32>
    %52 = arith.mulf %34, %51 : vector<8x128xf32>
    %53 = vector.broadcast %5 : vector<8x1xf32> to vector<8x128xf32>
    %54 = arith.addf %52, %53 : vector<8x128xf32>
    %cst_12 = arith.constant 0.00999999977 : f32
    %55 = vector.broadcast %cst_12 : f32 to vector<8x128xf32>
    %56 = arith.mulf %55, %54 : vector<8x128xf32>
    %57 = arith.maximumf %54, %56 : vector<8x128xf32>
    %c0_13 = arith.constant 0 : index
    %c0_14 = arith.constant 0 : index
    %58 = vector.load %arg2[%c0_13, %c0_14] : memref<16x8xf32, #tpu.memory_space<vmem>>, vector<16x8xf32>
    %cst_15 = arith.constant dense<0.000000e+00> : vector<16x128xf32>
    %59 = tpu.matmul %58, %57, %cst_15 {dimension_numbers = #tpu.dot_dimension_numbers<[1], [0], [0], [1], [0, 0, 1, 1], [], []>} : vector<16x8xf32>, vector<8x128xf32>, vector<16x128xf32> -> vector<16x128xf32>
    %60 = vector.broadcast %6 : vector<16x1xf32> to vector<16x128xf32>
    %61 = arith.addf %59, %60 : vector<16x128xf32>
    %62 = vector.extract_strided_slice %61 {offsets = [0, 127], sizes = [16, 1], strides = [1, 1]} : vector<16x128xf32> to vector<16x1xf32>
    %cst_16 = arith.constant dense<0.000000e+00> : vector<16xf32>
    %63 = vector.multi_reduction <add>, %61, %cst_16 [1] : vector<16x128xf32> to vector<16xf32>
    %64 = vector.shape_cast %63 : vector<16xf32> to vector<16x1xf32>
    %c8_i32 = arith.constant 8 : i32
    %65 = tpu.dynamic_rotate %64 by %c8_i32 dim 0 : vector<16x1xf32>, i32 -> vector<16x1xf32>
    %66 = arith.addf %64, %65 : vector<16x1xf32>
    %cst_17 = arith.constant 2.200000e+02 : f32
    %67 = vector.broadcast %cst_17 : f32 to vector<16x1xf32>
    %68 = arith.mulf %67, %62 : vector<16x1xf32>
    %69 = arith.subf %66, %68 : vector<16x1xf32>
    %cst_18 = arith.constant 0.027777778 : f32
    %70 = vector.broadcast %cst_18 : f32 to vector<16x1xf32>
    %71 = arith.mulf %69, %70 : vector<16x1xf32>
    %72 = vector.broadcast %71 : vector<16x1xf32> to vector<16x128xf32>
    %73 = arith.subf %61, %72 : vector<16x128xf32>
    %74 = arith.subf %62, %71 : vector<16x1xf32>
    %75 = arith.mulf %73, %73 : vector<16x128xf32>
    %cst_19 = arith.constant dense<0.000000e+00> : vector<16xf32>
    %76 = vector.multi_reduction <add>, %75, %cst_19 [1] : vector<16x128xf32> to vector<16xf32>
    %77 = vector.shape_cast %76 : vector<16xf32> to vector<16x1xf32>
    %c8_i32_20 = arith.constant 8 : i32
    %78 = tpu.dynamic_rotate %77 by %c8_i32_20 dim 0 : vector<16x1xf32>, i32 -> vector<16x1xf32>
    %79 = arith.addf %77, %78 : vector<16x1xf32>
    %80 = arith.mulf %74, %74 : vector<16x1xf32>
    %cst_21 = arith.constant 2.200000e+02 : f32
    %81 = vector.broadcast %cst_21 : f32 to vector<16x1xf32>
    %82 = arith.mulf %81, %80 : vector<16x1xf32>
    %83 = arith.subf %79, %82 : vector<16x1xf32>
    %cst_22 = arith.constant 0.027777778 : f32
    %84 = vector.broadcast %cst_22 : f32 to vector<16x1xf32>
    %85 = arith.mulf %83, %84 : vector<16x1xf32>
    %cst_23 = arith.constant 9.99999974E-6 : f32
    %86 = vector.broadcast %cst_23 : f32 to vector<16x1xf32>
    %87 = arith.addf %85, %86 : vector<16x1xf32>
    %88 = math.rsqrt %87 : vector<16x1xf32>
    %89 = arith.mulf %88, %7 : vector<16x1xf32>
    %90 = vector.broadcast %89 : vector<16x1xf32> to vector<16x128xf32>
    %91 = arith.mulf %73, %90 : vector<16x128xf32>
    %92 = vector.broadcast %8 : vector<16x1xf32> to vector<16x128xf32>
    %93 = arith.addf %91, %92 : vector<16x128xf32>
    %cst_24 = arith.constant 0.00999999977 : f32
    %94 = vector.broadcast %cst_24 : f32 to vector<16x128xf32>
    %95 = arith.mulf %94, %93 : vector<16x128xf32>
    %96 = arith.maximumf %93, %95 : vector<16x128xf32>
    %c0_25 = arith.constant 0 : index
    %c0_26 = arith.constant 0 : index
    %97 = vector.load %arg4[%c0_25, %c0_26] : memref<16x128xf32, #tpu.memory_space<vmem>>, vector<16x128xf32>
    tpu.vector_store %arg4[%c0_25, %c0_26], %96 {strides = array<i32>} : memref<16x128xf32, #tpu.memory_space<vmem>>, vector<16x128xf32>,
    return
  }
}

</mosaic_0001>

<llo_original>
// kernel: tpu_custom_call.1
$region0: #{tpu_custom_call.1}
  #allocation0 [shape = 'u32[]', space=smem, size = 0x4, offset = 0x4, fixed_abs, tag = 'smem constant byte address 0x4 - core index']
  #allocation1 [shape = 'u32[144,128]{1,0:T(1,128)}', space=vmem, size = 0x12000, scoped, tag = 'internal scratch']
  %s0 = inlined_call_operand.vmem [shape: f32[8,128], index: 0, kind: input, shape index: {}]
  %s1 = inlined_call_operand.vmem [shape: f32[8,6], index: 1, kind: input, shape index: {}]
  %s2 = inlined_call_operand.vmem [shape: f32[16,8], index: 2, kind: input, shape index: {}]
  %s3 = inlined_call_operand.vmem [shape: f32[16,3], index: 3, kind: input, shape index: {}]
  %s4 = inlined_call_operand.hbm [shape: f32[16,128], index: 4, kind: output, shape index: {}]
  %s5 = sld [smem:[#allocation0]]
  $region26: #{tpu_custom_call.1} parent=0
    _
  %s7 = ssub.s32 1, %s5
  %s8 = scalar_select 0, %s7, %s5
  $region1: #{tpu_custom_call.1} parent=0
    #allocation2 [shape = 'u8[8192]{0}', space=vmem, size = 0x2000, scoped, tag = 'output window, operand 0, single buffered']
    #allocation3 [shape = 's32[1]{0}', space=sflag, size = 0x4, scoped, tag = 'scoped memory for tpu_custom_call.1']
    %9 = vsyncpa [#allocation3], 0
    // Predicated region
    $region2: #{tpu_custom_call.1} parent=1 // pred_check
      _
    $region3: #{tpu_custom_call.1} parent=1 // pred_check_branch
      %11 = sbr.rel (0) target = $region5
    $region4: #{tpu_custom_call.1} parent=1 // pred_region
      _
    $region5: #{tpu_custom_call.1} parent=1 // pred_fallthru
      _
    // Predicated region
    $region6: #{tpu_custom_call.1} parent=1 // pred_check
      _
    $region7: #{tpu_custom_call.1} parent=1 // pred_check_branch
      %13 = sbr.rel (0) target = $region9
    $region8: #{tpu_custom_call.1} parent=1 // pred_region
      _
    $region9: #{tpu_custom_call.1} parent=1 // pred_fallthru
      _
    // Predicated region
    $region10: #{tpu_custom_call.1} parent=1 // pred_check
      _
    $region11: #{tpu_custom_call.1} parent=1 // pred_check_branch
      %15 = sbr.rel (0) target = $region13
    $region12: #{tpu_custom_call.1} parent=1 // pred_region
      _
    $region13: #{tpu_custom_call.1} parent=1 // pred_fallthru
      _
    // Predicated region
    $region14: #{tpu_custom_call.1} parent=1 // pred_check
      _
    $region15: #{tpu_custom_call.1} parent=1 // pred_check_branch
      %17 = sbr.rel (0) target = $region17
    $region16: #{tpu_custom_call.1} parent=1 // pred_region
      _
    $region17: #{tpu_custom_call.1} parent=1 // pred_fallthru
      _
    %v18 = vld [vmem:[%s0] sm:$0xff]
    %v19 = vld [vmem:[%s1] sm:$0xff]
    %v20 = vld [vmem:[%s3] sm:$0xff]
    %v21 = vld [vmem:[%s3 + $0x8] sm:$0xff]
    %23 = vset.pattern.permute.xlu0 2
    %24 = vperm.xlu0 %23, %v19
    %v25 = vpop.permute.xlu0 %24
    %v27 = vmul.f32 %v18, %v25
    %28 = vrot.lane.b32.xlu0 %v18, 127
    %v29 = vpop.permute.xlu0 %28
    %30 = vset.pattern.permute.xlu0 1
    %31 = vperm.xlu0 %30, %v19
    %v32 = vpop.permute.xlu0 %31
    %v34 = vmul.f32 %v29, %v32
    %v35 = vadd.f32 %v27, %v34
    %36 = vrot.lane.b32.xlu0 %v18, 126
    %v37 = vpop.permute.xlu0 %36
    %38 = vset.pattern.permute.xlu0 0
    %39 = vperm.xlu0 %38, %v19
    %v40 = vpop.permute.xlu0 %39
    %v42 = vmul.f32 %v37, %v40
    %v43 = vadd.f32 %v35, %v42
    %44 = vset.pattern.permute.xlu0 3
    %45 = vperm.xlu0 %44, %v19
    %v46 = vpop.permute.xlu0 %45
    %v48 = vadd.f32 %v43, %v46
    %49 = vadd.xlane.f32.xlu0 %v48
    %v50 = vpop.xlane.xlu0 %49
    %v51 = vrot.slane %v50, 4
    %v52 = vadd.f32 %v50, %v51
    %v53 = vmul.f32 %v19, 220.0
    %55 = vrot.lane.b32.xlu0 %v53, 125
    %v56 = vpop.permute.xlu0 %55
    %v58 = vsub.f32 %v52, %v56
    %v59 = vmul.f32 %v58, 0.027777778
    %61 = vset.pattern.permute.xlu0 0
    %62 = vperm.xlu0 %61, %v59
    %v63 = vpop.permute.xlu0 %62
    %v65 = vsub.f32 %v48, %v63
    %66 = vrot.lane.b32.xlu0 %v59, 3
    %v67 = vpop.permute.xlu0 %66
    %v69 = vsub.f32 %v19, %v67
    %v70 = vmul.f32 %v65, %v65
    %71 = vadd.xlane.f32.xlu0 %v70
    %v72 = vpop.xlane.xlu0 %71
    %v73 = vrot.slane %v72, 4
    %v74 = vadd.f32 %v72, %v73
    %v75 = vmul.f32 %v69, %v69
    %v76 = vmul.f32 %v75, 220.0
    %78 = vrot.lane.b32.xlu0 %v76, 125
    %v79 = vpop.permute.xlu0 %78
    %v81 = vsub.f32 %v74, %v79
    %v82 = vmul.f32 %v81, 0.027777778
    %v83 = vadd.f32 %v82, 1e-05
    %v84 = vrsqrt.pop %v83
    %85 = vrot.lane.b32.xlu0 %v19, 124
    %v86 = vpop.permute.xlu0 %85
    %v88 = vmul.f32 %v84, %v86
    %90 = vset.pattern.permute.xlu0 0
    %91 = vperm.xlu0 %90, %v88
    %v92 = vpop.permute.xlu0 %91
    %v94 = vmul.f32 %v65, %v92
    %95 = vset.pattern.permute.xlu0 5
    %96 = vperm.xlu0 %95, %v19
    %v97 = vpop.permute.xlu0 %96
    %v99 = vadd.f32 %v94, %v97
    %v100 = vmul.f32 %v99, 0.01
    %v101 = vmax.f32 %v99, %v100
    %v102 = vld [vmem:[%s2] sm:$0xff]
    %v103 = vld [vmem:[%s2 + $0x8] sm:$0xff]
    %105 = vset.pattern.permute.xlu0 0
    %106 = vperm.xlu0 %105, %v20
    %v107 = vpop.permute.xlu0 %106
    %110 = vset.pattern.permute.xlu0 0
    %111 = vperm.xlu0 %110, %v21
    %v112 = vpop.permute.xlu0 %111
    %vm114 = vcmask 64512
    %v116 = vsel %vm114, %v102, 0
    %v119 = vsel %vm114, %v103, 0
    %121 = vmatprep.subr.mxu0 0.0
    %122 = vmatpush1.msra.mxu0 %v101
    %123 = vmatprep.subr.mxu0 0.0
    %124 = vmatpush1.msra.mxu0 0.0
    %125 = vmatprep.subr.mxu0 0.0
    %126 = vmatpush1.msra.mxu0 0.0
    %127 = vmatprep.subr.mxu0 0.0
    %128 = vmatpush1.msra.mxu0 0.0
    %129 = vmatprep.subr.mxu0 0.0
    %130 = vmatpush1.msra.mxu0 0.0
    %131 = vmatprep.subr.mxu0 0.0
    %132 = vmatpush1.msra.mxu0 0.0
    %133 = vmatprep.subr.mxu0 0.0
    %134 = vmatpush1.msra.mxu0 0.0
    %135 = vmatprep.subr.mxu0 0.0
    %136 = vmatpush1.msra.mxu0 0.0
    %137 = vmatprep.subr.mxu0 0.0
    %138 = vmatpush1.msra.mxu0 0.0
    %139 = vmatprep.subr.mxu0 0.0
    %140 = vmatpush1.msra.mxu0 0.0
    %141 = vmatprep.subr.mxu0 0.0
    %142 = vmatpush1.msra.mxu0 0.0
    %143 = vmatprep.subr.mxu0 0.0
    %144 = vmatpush1.msra.mxu0 0.0
    %145 = vmatprep.subr.mxu0 0.0
    %146 = vmatpush1.msra.mxu0 0.0
    %147 = vmatprep.subr.mxu0 0.0
    %148 = vmatpush1.msra.mxu0 0.0
    %149 = vmatprep.subr.mxu0 0.0
    %150 = vmatpush1.msra.mxu0 0.0
    %151 = vmatprep.subr.mxu0 0.0
    %152 = vmatpush1.msra.mxu0 0.0
    %153 = vmatprep.subr.mxu0 0.0
    %154 = vmatpush1.msra.mxu0 0.0
    %155 = vmatprep.subr.mxu0 0.0
    %156 = vmatpush1.msra.mxu0 0.0
    %157 = vmatprep.subr.mxu0 0.0
    %158 = vmatpush1.msra.mxu0 0.0
    %159 = vmatprep.subr.mxu0 0.0
    %160 = vmatpush1.msra.mxu0 0.0
    %161 = vmatprep.subr.mxu0 0.0
    %162 = vmatpush1.msra.mxu0 0.0
    %163 = vmatprep.subr.mxu0 0.0
    %164 = vmatpush1.msra.mxu0 0.0
    %165 = vmatprep.subr.mxu0 0.0
    %166 = vmatpush1.msra.mxu0 0.0
    %167 = vmatprep.subr.mxu0 0.0
    %168 = vmatpush1.msra.mxu0 0.0
    %169 = vmatprep.subr.mxu0 0.0
    %170 = vmatpush1.msra.mxu0 0.0
    %171 = vmatprep.subr.mxu0 0.0
    %172 = vmatpush1.msra.mxu0 0.0
    %173 = vmatprep.subr.mxu0 0.0
    %174 = vmatpush1.msra.mxu0 0.0
    %175 = vmatprep.subr.mxu0 0.0
    %176 = vmatpush1.msra.mxu0 0.0
    %177 = vmatprep.subr.mxu0 0.0
    %178 = vmatpush1.msra.mxu0 0.0
    %179 = vmatprep.subr.mxu0 0.0
    %180 = vmatpush1.msra.mxu0 0.0
    %181 = vmatprep.subr.mxu0 0.0
    %182 = vmatpush1.msra.mxu0 0.0
    %183 = vmatprep.subr.mxu0 0.0
    %184 = vmatpush1.msra.mxu0 0.0
    %185 = vmatprep.mubr.f32.mxu0 0.0
    %186 = vmatmul.mubr.f32.gmra.mrb[0].mxu0 %v116
    %v187 = vpop.f32.mrb[0].mxu0
    %v188 = vadd.f32 %v107, %v187
    %v189 = vpop.f32.mrb[0].mxu0
    %190 = vmatprep.mubr.f32.mxu0 0.0
    %191 = vmatmul.mubr.f32.gmra.mrb[0].mxu0 %v119
    %v192 = vpop.f32.mrb[0].mxu0
    %v193 = vadd.f32 %v112, %v192
    %v194 = vpop.f32.mrb[0].mxu0
    %195 = vdwg.mxu0
    %196 = vadd.xlane.f32.xlu0 %v188
    %v197 = vpop.xlane.xlu0 %196
    %198 = vadd.xlane.f32.xlu0 %v193
    %v199 = vpop.xlane.xlu0 %198
    %v200 = vadd.f32 %v197, %v199
    %v201 = vmul.f32 %v188, 220.0
    %v202 = vmul.f32 %v193, 220.0
    %205 = vrot.lane.b32.xlu0 %v201, 1
    %v206 = vpop.permute.xlu0 %205
    %207 = vrot.lane.b32.xlu0 %v202, 1
    %v208 = vpop.permute.xlu0 %207
    %v211 = vsub.f32 %v200, %v206
    %v212 = vsub.f32 %v200, %v208
    %v213 = vmul.f32 %v211, 0.027777778
    %v214 = vmul.f32 %v212, 0.027777778
    %216 = vset.pattern.permute.xlu0 0
    %217 = vperm.xlu0 %216, %v213
    %v218 = vpop.permute.xlu0 %217
    %221 = vset.pattern.permute.xlu0 0
    %222 = vperm.xlu0 %221, %v214
    %v223 = vpop.permute.xlu0 %222
    %v225 = vsub.f32 %v188, %v218
    %v226 = vsub.f32 %v193, %v223
    %227 = vrot.lane.b32.xlu0 %v213, 127
    %v228 = vpop.permute.xlu0 %227
    %229 = vrot.lane.b32.xlu0 %v214, 127
    %v230 = vpop.permute.xlu0 %229
    %v233 = vsub.f32 %v188, %v228
    %v234 = vsub.f32 %v193, %v230
    %v235 = vmul.f32 %v225, %v225
    %v236 = vmul.f32 %v226, %v226
    %237 = vadd.xlane.f32.xlu0 %v235
    %v238 = vpop.xlane.xlu0 %237
    %239 = vadd.xlane.f32.xlu0 %v236
    %v240 = vpop.xlane.xlu0 %239
    %v241 = vadd.f32 %v238, %v240
    %v242 = vmul.f32 %v233, %v233
    %v243 = vmul.f32 %v234, %v234
    %v244 = vmul.f32 %v242, 220.0
    %v245 = vmul.f32 %v243, 220.0
    %248 = vrot.lane.b32.xlu0 %v244, 1
    %v249 = vpop.permute.xlu0 %248
    %250 = vrot.lane.b32.xlu0 %v245, 1
    %v251 = vpop.permute.xlu0 %250
    %v254 = vsub.f32 %v241, %v249
    %v255 = vsub.f32 %v241, %v251
    %v256 = vmul.f32 %v254, 0.027777778
    %v257 = vmul.f32 %v255, 0.027777778
    %v258 = vadd.f32 %v256, 1e-05
    %v259 = vadd.f32 %v257, 1e-05
    %v260 = vrsqrt.pop %v258
    %v261 = vrsqrt.pop %v259
    %262 = vrot.lane.b32.xlu0 %v20, 127
    %v263 = vpop.permute.xlu0 %262
    %264 = vrot.lane.b32.xlu0 %v21, 127
    %v265 = vpop.permute.xlu0 %264
    %v268 = vmul.f32 %v260, %v263
    %v269 = vmul.f32 %v261, %v265
    %271 = vset.pattern.permute.xlu0 0
    %272 = vperm.xlu0 %271, %v268
    %v273 = vpop.permute.xlu0 %272
    %276 = vset.pattern.permute.xlu0 0
    %277 = vperm.xlu0 %276, %v269
    %v278 = vpop.permute.xlu0 %277
    %v280 = vmul.f32 %v225, %v273
    %v281 = vmul.f32 %v226, %v278
    %282 = vset.pattern.permute.xlu0 2
    %283 = vperm.xlu0 %282, %v20
    %v284 = vpop.permute.xlu0 %283
    %286 = vset.pattern.permute.xlu0 2
    %287 = vperm.xlu0 %286, %v21
    %v288 = vpop.permute.xlu0 %287
    %v290 = vadd.f32 %v280, %v284
    %v291 = vadd.f32 %v281, %v288
    %v292 = vmul.f32 %v290, 0.01
    %v293 = vmul.f32 %v291, 0.01
    %v294 = vmax.f32 %v290, %v292
    %v295 = vmax.f32 %v291, %v293
    %296 = vst [vmem:[#allocation2] sm:$0xff] %v294
    %297 = vst [vmem:[#allocation2 + $0x8] sm:$0xff] %v295
    // Predicated region
    $region18: #{tpu_custom_call.1} parent=1 // pred_check
      _
    $region19: #{tpu_custom_call.1} parent=1 // pred_check_branch
      %299 = sbr.rel (0) target = $region21
    $region20: #{tpu_custom_call.1} parent=1 // pred_region
      %s301 = ssub.s32 256, 256
      %302 = vsyncadd [#allocation3], %s301
      %s303 = sshll.u32 [#allocation2], 4
      %s304 = int_to_ptr.vmem [resolvable:$true] %s303
      %309 = dma.vmem_to_hbm [thread:$0]  %s304, 256, %s4, [#allocation3], 128, 128, 8
    $region21: #{tpu_custom_call.1} parent=1 // pred_fallthru
      _
    // Predicated region
    $region22: #{tpu_custom_call.1} parent=1 // pred_check
      _
    $region23: #{tpu_custom_call.1} parent=1 // pred_check_branch
      %311 = sbr.rel (0) target = $region25
    $region24: #{tpu_custom_call.1} parent=1 // pred_region
      %312 = dma.done [#allocation3], 256
    $region25: #{tpu_custom_call.1} parent=1 // pred_fallthru
      _
    %313 = vsyncpa [#allocation3], 1

</llo_original>
